<compile_context>
chip_gen: v5e
topology: v5e:2x2
jax: 0.10.0
libtpu: 0.0.40
codegen_flags: <defaults>
</compile_context>

<pallas_src>
import jax
import jax.numpy as jnp
from jax.experimental import pallas as pl
from jax.experimental.pallas import tpu as pltpu


def _round_up(x, m):
    return (x + m - 1) // m * m


def _linear_relu_kernel(x_ref, w_ref, b_ref, o_ref, acc_ref):
    """Computes one (tm, tn) output tile; the K reduction runs over grid axis 2."""
    k = pl.program_id(2)

    @pl.when(k == 0)
    def _init():
        acc_ref[...] = jnp.zeros_like(acc_ref)

    acc_ref[...] += jnp.dot(
        x_ref[...], w_ref[...], preferred_element_type=jnp.float32
    )

    @pl.when(k == pl.num_programs(2) - 1)
    def _epilogue():
        # Bias + ReLU applied exactly once, after the full K reduction.
        acc = acc_ref[...] + b_ref[...]          # (1, tn) broadcasts over tm rows
        o_ref[...] = jnp.maximum(acc, 0.0).astype(o_ref.dtype)


def linear_relu(x, w, b, *, tm=128, tn=128, tk=128, compute_dtype=None):
    """y = relu(x @ w.T + b)   (PyTorch nn.Linear + F.relu semantics).

    x: (B, in_f) ; w: (out_f, in_f) PyTorch layout ; b: (out_f,)  ->  (B, out_f)
    """
    B, in_f = x.shape
    out_f, _ = w.shape
    out_dtype = x.dtype

    # Pre-transpose once in plain JAX so the kernel does a plain x @ W matmul.
    w_t = w.T                                                  # (in_f, out_f)

    # Lane-dense / MXU-friendly padded sizes. Tiles shrink for tiny problems but
    # stay (8, 128)-aligned so stores are unmasked and the MXU depth is full.
    tm = min(tm, _round_up(B, 8))
    tn = min(tn, _round_up(out_f, 128))
    tk = min(tk, _round_up(in_f, 128))
    Mp, Np, Kp = _round_up(B, tm), _round_up(out_f, tn), _round_up(in_f, tk)

    x_p = jnp.pad(x, ((0, Mp - B), (0, Kp - in_f)))
    w_p = jnp.pad(w_t, ((0, Kp - in_f), (0, Np - out_f)))
    b_p = jnp.pad(b, (0, Np - out_f)).reshape(1, Np)

    if compute_dtype is not None:               # e.g. jnp.bfloat16 on v6e/v7x MXU
        x_p = x_p.astype(compute_dtype)
        w_p = w_p.astype(compute_dtype)

    grid = (Mp // tm, Np // tn, Kp // tk)       # reduction (K) axis last

    cost = pl.CostEstimate(
        flops=2 * Mp * Kp * Np,
        transcendentals=0,
        bytes_accessed=4 * (Mp * Kp + Kp * Np + Mp * Np + Np),
    )

    out_p = pl.pallas_call(
        _linear_relu_kernel,
        out_shape=jax.ShapeDtypeStruct((Mp, Np), out_dtype),
        grid=grid,
        in_specs=[
            pl.BlockSpec((tm, tk), lambda i, j, k: (i, k)),    # x tile
            pl.BlockSpec((tk, tn), lambda i, j, k: (k, j)),    # W^T tile
            pl.BlockSpec((1, tn), lambda i, j, k: (0, j)),     # bias tile (N only)
        ],
        out_specs=pl.BlockSpec((tm, tn), lambda i, j, k: (i, j)),
        scratch_shapes=[pltpu.VMEM((tm, tn), jnp.float32)],
        compiler_params=pltpu.CompilerParams(
            dimension_semantics=("parallel", "parallel", "arbitrary"),
            vmem_limit_bytes=32 * 1024 * 1024,   # safe on v7x's 64 MiB VMEM too
        ),
        cost_estimate=cost,
    )(x_p, w_p, b_p)

    # Slice the lane-padding back off.
    return out_p[:B, :out_f]


if __name__ == "__main__":
    def make_case(key, batch, in_features, out_features):
        k_x, k_w, k_b = jax.random.split(key, 3)
        # Mimic nn.Linear's uniform(-1/sqrt(in), 1/sqrt(in)) init.
        bound = 1.0 / jnp.sqrt(jnp.float32(in_features))
        w = jax.random.uniform(k_w, (out_features, in_features), jnp.float32,
                               minval=-bound, maxval=bound)
        b = jax.random.uniform(k_b, (out_features,), jnp.float32,
                               minval=-bound, maxval=bound)
        x = jax.random.normal(k_x, (batch, in_features), jnp.float32)
        return x, w, b

    # Case 1: the module's toy size (padding path, single grid step).
    x, w, b = make_case(jax.random.PRNGKey(0), 8, 32, 32)
    y = jax.block_until_ready(linear_relu(x, w, b))
    y_ref = jnp.maximum(x @ w.T + b, 0.0)
    assert jnp.allclose(y, y_ref, atol=1e-4, rtol=1e-4), "case 1 mismatch vs reference"

    # Case 2: a shape that exercises the tiled M/N/K grid and the K epilogue.
    x2, w2, b2 = make_case(jax.random.PRNGKey(1), 16, 160, 200)
    y2 = jax.block_until_ready(linear_relu(x2, w2, b2))
    y2_ref = jnp.maximum(x2 @ w2.T + b2, 0.0)
    assert jnp.allclose(y2, y2_ref, atol=1e-4, rtol=1e-4), "case 2 mismatch vs reference"

    print("KERNEL_OK")
</pallas_src>

<mosaic_0001>
module attributes {stable_mosaic.version = 11 : i64} {
  func.func @_linear_relu_kernel(%arg0: i32, %arg1: i32, %arg2: i32, %arg3: memref<8x128xf32, #tpu.memory_space<vmem>>, %arg4: memref<128x128xf32, #tpu.memory_space<vmem>>, %arg5: memref<1x128xf32, #tpu.memory_space<vmem>>, %arg6: memref<8x128xf32, #tpu.memory_space<vmem>>, %arg7: memref<8x128xf32, #tpu.memory_space<vmem>>) attributes {dimension_semantics = [#tpu.dimension_semantics<parallel>, #tpu.dimension_semantics<parallel>, #tpu.dimension_semantics<arbitrary>], iteration_bounds = array<i64: 1, 1, 1>, scalar_prefetch = 0 : i64, scratch_operands = 1 : i64, tpu.core_type = #tpu.core_type<tc>, window_params = [{transform_indices = @transform_0, window_bounds = array<i64: 8, 128>}, {transform_indices = @transform_1, window_bounds = array<i64: 128, 128>}, {transform_indices = @transform_2, window_bounds = array<i64: 1, 128>}, {transform_indices = @transform_3, window_bounds = array<i64: 8, 128>}]} {
    %c0_i32 = arith.constant 0 : i32
    %0 = arith.cmpi eq, %arg2, %c0_i32 : i32
    %1 = arith.extui %0 : i1 to i32
    %c0_i32_0 = arith.constant 0 : i32
    %2 = arith.cmpi ne, %1, %c0_i32_0 : i32
    scf.if %2 {
      %cst_10 = arith.constant 0.000000e+00 : f32
      %12 = vector.broadcast %cst_10 : f32 to vector<8x128xf32>
      %c0_11 = arith.constant 0 : index
      %c0_12 = arith.constant 0 : index
      %13 = vector.load %arg7[%c0_11, %c0_12] : memref<8x128xf32, #tpu.memory_space<vmem>>, vector<8x128xf32>
      tpu.vector_store %arg7[%c0_11, %c0_12], %12 {strides = array<i32>} : memref<8x128xf32, #tpu.memory_space<vmem>>, vector<8x128xf32>,
    } else {
    }
    %c0 = arith.constant 0 : index
    %c0_1 = arith.constant 0 : index
    %3 = vector.load %arg7[%c0, %c0_1] : memref<8x128xf32, #tpu.memory_space<vmem>>, vector<8x128xf32>
    %c0_2 = arith.constant 0 : index
    %c0_3 = arith.constant 0 : index
    %4 = vector.load %arg3[%c0_2, %c0_3] : memref<8x128xf32, #tpu.memory_space<vmem>>, vector<8x128xf32>
    %c0_4 = arith.constant 0 : index
    %c0_5 = arith.constant 0 : index
    %5 = vector.load %arg4[%c0_4, %c0_5] : memref<128x128xf32, #tpu.memory_space<vmem>>, vector<128x128xf32>
    %cst = arith.constant dense<0.000000e+00> : vector<8x128xf32>
    %6 = tpu.matmul %4, %5, %cst {dimension_numbers = #tpu.dot_dimension_numbers<[1], [0], [0], [1], [0, 0, 1, 1], [], []>} : vector<8x128xf32>, vector<128x128xf32>, vector<8x128xf32> -> vector<8x128xf32>
    %7 = arith.addf %3, %6 : vector<8x128xf32>
    %c0_6 = arith.constant 0 : index
    %c0_7 = arith.constant 0 : index
    %8 = vector.load %arg7[%c0_6, %c0_7] : memref<8x128xf32, #tpu.memory_space<vmem>>, vector<8x128xf32>
    tpu.vector_store %arg7[%c0_6, %c0_7], %7 {strides = array<i32>} : memref<8x128xf32, #tpu.memory_space<vmem>>, vector<8x128xf32>,
    %c0_i32_8 = arith.constant 0 : i32
    %9 = arith.cmpi eq, %arg2, %c0_i32_8 : i32
    %10 = arith.extui %9 : i1 to i32
    %c0_i32_9 = arith.constant 0 : i32
    %11 = arith.cmpi ne, %10, %c0_i32_9 : i32
    scf.if %11 {
      %c0_10 = arith.constant 0 : index
      %c0_11 = arith.constant 0 : index
      %12 = vector.load %arg7[%c0_10, %c0_11] : memref<8x128xf32, #tpu.memory_space<vmem>>, vector<8x128xf32>
      %c0_12 = arith.constant 0 : index
      %c0_13 = arith.constant 0 : index
      %13 = vector.load %arg5[%c0_12, %c0_13] : memref<1x128xf32, #tpu.memory_space<vmem>>, vector<1x128xf32>
      %14 = vector.broadcast %13 : vector<1x128xf32> to vector<8x128xf32>
      %15 = arith.addf %12, %14 : vector<8x128xf32>
      %cst_14 = arith.constant 0.000000e+00 : f32
      %16 = vector.broadcast %cst_14 : f32 to vector<8x128xf32>
      %17 = arith.maximumf %15, %16 : vector<8x128xf32>
      %c0_15 = arith.constant 0 : index
      %c0_16 = arith.constant 0 : index
      %18 = vector.load %arg6[%c0_15, %c0_16] : memref<8x128xf32, #tpu.memory_space<vmem>>, vector<8x128xf32>
      tpu.vector_store %arg6[%c0_15, %c0_16], %17 {strides = array<i32>} : memref<8x128xf32, #tpu.memory_space<vmem>>, vector<8x128xf32>,
    } else {
    }
    return
  }
  func.func @transform_0(%arg0: i32, %arg1: i32, %arg2: i32) -> (i32, i32) {
    %c0_i32 = arith.constant 0 : i32
    return %arg0, %arg2 : i32, i32
  }
  func.func @transform_1(%arg0: i32, %arg1: i32, %arg2: i32) -> (i32, i32) {
    %c0_i32 = arith.constant 0 : i32
    return %arg2, %arg1 : i32, i32
  }
  func.func @transform_2(%arg0: i32, %arg1: i32, %arg2: i32) -> (i32, i32) {
    %c0_i32 = arith.constant 0 : i32
    %c0_i32_0 = arith.constant 0 : i32
    return %c0_i32, %arg1 : i32, i32
  }
  func.func @transform_3(%arg0: i32, %arg1: i32, %arg2: i32) -> (i32, i32) {
    %c0_i32 = arith.constant 0 : i32
    return %arg0, %arg1 : i32, i32
  }
}

</mosaic_0001>

<llo_original>
// kernel: tpu_custom_call.1
$region0: #{tpu_custom_call.1}
  #allocation0 [shape = 'u32[]', space=smem, size = 0x4, offset = 0x4, fixed_abs, tag = 'smem constant byte address 0x4 - core index']
  #allocation1 [shape = 'u32[72,128]{1,0:T(1,128)}', space=vmem, size = 0x9000, scoped, tag = 'internal scratch']
  #allocation2 [shape = 'f32[8,128]{1,0:T(8,128)}', space=vmem, size = 0x1000, scoped, tag = 'scratch operand']
  %s0 = inlined_call_operand.hbm [shape: f32[8,128], index: 0, kind: input, shape index: {}]
  %s1 = inlined_call_operand.hbm [shape: f32[128,128], index: 1, kind: input, shape index: {}]
  %s2 = inlined_call_operand.vmem [shape: f32[1,128], index: 2, kind: input, shape index: {}]
  %s3 = inlined_call_operand.hbm [shape: f32[8,128], index: 3, kind: output, shape index: {}]
  %s4 = sld [smem:[#allocation0]]
  $region38: #{tpu_custom_call.1} parent=0
    _
  %s6 = ssub.s32 1, %s4
  %s7 = scalar_select 0, %s6, %s4
  $region1: #{tpu_custom_call.1} parent=0
    #allocation3 [shape = 'u8[4096]{0}', space=vmem, size = 0x1000, scoped, tag = 'input window, operand 0, single buffered']
    #allocation4 [shape = 's32[1]{0}', space=sflag, size = 0x4, scoped, tag = 'scoped memory for tpu_custom_call.1']
    #allocation5 [shape = 's32[1]{0}', space=sflag, size = 0x4, scoped, tag = 'scoped memory for tpu_custom_call.1']
    #allocation6 [shape = 'u8[65536]{0}', space=vmem, size = 0x10000, scoped, tag = 'input window, operand 1, single buffered']
    #allocation7 [shape = 's32[1]{0}', space=sflag, size = 0x4, scoped, tag = 'scoped memory for tpu_custom_call.1']
    #allocation8 [shape = 'u8[4096]{0}', space=vmem, size = 0x1000, scoped, tag = 'output window, operand 0, single buffered']
    %8 = vsyncpa [#allocation4], 0
    %9 = vsyncpa [#allocation7], 0
    %10 = vsyncpa [#allocation5], 0
    // Predicated region
    $region2: #{tpu_custom_call.1} parent=1 // pred_check
      _
    $region3: #{tpu_custom_call.1} parent=1 // pred_check_branch
      %12 = sbr.rel (0) target = $region5
    $region4: #{tpu_custom_call.1} parent=1 // pred_region
      %14 = vsyncadd [#allocation4], 0
      %s16 = sshll.u32 %s0, 4
      %s17 = int_to_ptr.hbm [resolvable:$true] %s16
      %s18 = sshll.u32 [#allocation3], 4
      %s19 = int_to_ptr.vmem [resolvable:$true] %s18
      %21 = dma.hbm_to_vmem [thread:$0]  %s17, 128, %s19, [#allocation4]
    $region5: #{tpu_custom_call.1} parent=1 // pred_fallthru
      _
    // Predicated region
    $region6: #{tpu_custom_call.1} parent=1 // pred_check
      _
    $region7: #{tpu_custom_call.1} parent=1 // pred_check_branch
      %23 = sbr.rel (0) target = $region9
    $region8: #{tpu_custom_call.1} parent=1 // pred_region
      %25 = vsyncadd [#allocation7], 0
      %s26 = sshll.u32 %s1, 4
      %s27 = int_to_ptr.hbm [resolvable:$true] %s26
      %s28 = sshll.u32 [#allocation6], 4
      %s29 = int_to_ptr.vmem [resolvable:$true] %s28
      %34 = dma.hbm_to_vmem [thread:$0]  %s27, 2048, %s29, [#allocation7], 128, 128, 8
    $region9: #{tpu_custom_call.1} parent=1 // pred_fallthru
      _
    // Predicated region
    $region10: #{tpu_custom_call.1} parent=1 // pred_check
      _
    $region11: #{tpu_custom_call.1} parent=1 // pred_check_branch
      %36 = sbr.rel (0) target = $region13
    $region12: #{tpu_custom_call.1} parent=1 // pred_region
      _
    $region13: #{tpu_custom_call.1} parent=1 // pred_fallthru
      _
    // Predicated region
    $region14: #{tpu_custom_call.1} parent=1 // pred_check
      _
    $region15: #{tpu_custom_call.1} parent=1 // pred_check_branch
      %38 = sbr.rel (0) target = $region17
    $region16: #{tpu_custom_call.1} parent=1 // pred_region
      %40 = dma.done [#allocation4], 128
    $region17: #{tpu_custom_call.1} parent=1 // pred_fallthru
      _
    // Predicated region
    $region18: #{tpu_custom_call.1} parent=1 // pred_check
      _
    $region19: #{tpu_custom_call.1} parent=1 // pred_check_branch
      %42 = sbr.rel (0) target = $region21
    $region20: #{tpu_custom_call.1} parent=1 // pred_region
      %44 = dma.done [#allocation7], 2048
    $region21: #{tpu_custom_call.1} parent=1 // pred_fallthru
      _
    %p45 = scmp.eq.s32.totalorder 0, 0
    // Predicated region
    $region22: #{tpu_custom_call.1} parent=1 // pred_check
      %p46 = pneg %p45
    $region23: #{tpu_custom_call.1} parent=1 // pred_check_branch
      %48 = sbr.rel (%p46) target = $region25
    $region24: #{tpu_custom_call.1} parent=1 // pred_region
      %49 = vst [vmem:[#allocation2] sm:$0xff] 0.0
    $region25: #{tpu_custom_call.1} parent=1 // pred_fallthru
      _
    %v50 = vld [vmem:[#allocation2] sm:$0xff]
    %v51 = vld [vmem:[#allocation3] sm:$0xff]
    %v52 = vld [vmem:[#allocation6] sm:$0xff]
    %v53 = vld [vmem:[#allocation6 + $0x8] sm:$0xff]
    %v54 = vld [vmem:[#allocation6 + $0x10] sm:$0xff]
    %v55 = vld [vmem:[#allocation6 + $0x18] sm:$0xff]
    %v56 = vld [vmem:[#allocation6 + $0x20] sm:$0xff]
    %v57 = vld [vmem:[#allocation6 + $0x28] sm:$0xff]
    %v58 = vld [vmem:[#allocation6 + $0x30] sm:$0xff]
    %v59 = vld [vmem:[#allocation6 + $0x38] sm:$0xff]
    %v60 = vld [vmem:[#allocation6 + $0x40] sm:$0xff]
    %v61 = vld [vmem:[#allocation6 + $0x48] sm:$0xff]
    %v62 = vld [vmem:[#allocation6 + $0x50] sm:$0xff]
    %v63 = vld [vmem:[#allocation6 + $0x58] sm:$0xff]
    %v64 = vld [vmem:[#allocation6 + $0x60] sm:$0xff]
    %v65 = vld [vmem:[#allocation6 + $0x68] sm:$0xff]
    %v66 = vld [vmem:[#allocation6 + $0x70] sm:$0xff]
    %v67 = vld [vmem:[#allocation6 + $0x78] sm:$0xff]
    %68 = vmatpush.msra.mxu0 %v67
    %69 = vmatpush.msra.mxu0 %v66
    %70 = vmatpush.msra.mxu0 %v65
    %71 = vmatpush.msra.mxu0 %v64
    %72 = vmatpush.msra.mxu0 %v63
    %73 = vmatpush.msra.mxu0 %v62
    %74 = vmatpush.msra.mxu0 %v61
    %75 = vmatpush.msra.mxu0 %v60
    %76 = vmatpush.msra.mxu0 %v59
    %77 = vmatpush.msra.mxu0 %v58
    %78 = vmatpush.msra.mxu0 %v57
    %79 = vmatpush.msra.mxu0 %v56
    %80 = vmatpush.msra.mxu0 %v55
    %81 = vmatpush.msra.mxu0 %v54
    %82 = vmatpush.msra.mxu0 %v53
    %83 = vmatpush.msra.mxu0 %v52
    %84 = vmatmul.f32.gmra.mxu0 %v51
    %v85 = vpop.f32.mrf.mxu0
    %v86 = vadd.f32 0.0, %v85
    %87 = vdwg.mxu0
    %v88 = vadd.f32 %v50, %v86
    %89 = vst [vmem:[#allocation2] sm:$0xff] %v88
    // Predicated region
    $region26: #{tpu_custom_call.1} parent=1 // pred_check
      %p90 = pneg %p45
    $region27: #{tpu_custom_call.1} parent=1 // pred_check_branch
      %92 = sbr.rel (%p90) target = $region29
    $region28: #{tpu_custom_call.1} parent=1 // pred_region
      %v93 = vld [vmem:[#allocation2] sm:$0xff]
      %v94 = vld [vmem:[%s2] sm:$0x1]
      %v96 = vperm.slane %v94, 0
      %v98 = vadd.f32 %v93, %v96
      %v99 = vmax.f32 %v98, 0.0
      %100 = vst [vmem:[#allocation8] sm:$0xff] %v99
    $region29: #{tpu_custom_call.1} parent=1 // pred_fallthru
      _
    // Predicated region
    $region30: #{tpu_custom_call.1} parent=1 // pred_check
      _
    $region31: #{tpu_custom_call.1} parent=1 // pred_check_branch
      %102 = sbr.rel (0) target = $region33
    $region32: #{tpu_custom_call.1} parent=1 // pred_region
      %104 = vsyncadd [#allocation5], 0
      %s106 = sshll.u32 [#allocation8], 4
      %s107 = int_to_ptr.vmem [resolvable:$true] %s106
      %s108 = sshll.u32 %s3, 4
      %s109 = int_to_ptr.hbm [resolvable:$true] %s108
      %111 = dma.vmem_to_hbm [thread:$0]  %s107, 128, %s109, [#allocation5]
    $region33: #{tpu_custom_call.1} parent=1 // pred_fallthru
      _
    // Predicated region
    $region34: #{tpu_custom_call.1} parent=1 // pred_check
      _
    $region35: #{tpu_custom_call.1} parent=1 // pred_check_branch
      %113 = sbr.rel (0) target = $region37
    $region36: #{tpu_custom_call.1} parent=1 // pred_region
      %115 = dma.done [#allocation5], 128
    $region37: #{tpu_custom_call.1} parent=1 // pred_fallthru
      _
    %116 = vsyncpa [#allocation4], 1
    %117 = vsyncpa [#allocation7], 1
    %118 = vsyncpa [#allocation5], 1

</llo_original>
